<compile_context>
chip_gen: v7x
topology: tpu7x:2x2x1
jax: 0.10.0
libtpu: 0.0.40
codegen_flags: <defaults>
</compile_context>

<pallas_src>
import functools

import jax
import jax.numpy as jnp
from jax.experimental import pallas as pl
from jax.experimental.pallas import tpu as pltpu


_VMEM_LIMIT_BYTES = 40 * 1024 * 1024          # comfortable on v5e/v6e/v7x
_ONE_PASS_BUDGET_BYTES = 24 * 1024 * 1024     # 4 slabs + params must fit this
_APPLY_BLOCK_BUDGET_BYTES = 4 * 1024 * 1024   # per (1, C, T_tile) block


# ---------------------------------------------------------------------------
# One-pass fused kernel (small C*T): mean + FC + sigmoid + scale in one body.
# ---------------------------------------------------------------------------
def _afms_fused_kernel(x_ref, w_ref, b_ref, alpha_ref, o_ref):
    # x_ref: (1, C, T); w_ref: (C, C) [out, in]; b_ref, alpha_ref: (C, 1)
    xf = x_ref[0].astype(jnp.float32)                       # (C, T), f32 accum
    m = jnp.mean(xf, axis=1)                                # (C,)
    # FC as VPU elementwise-mul + lane reduce (avoid an N=1 MXU mat-vec):
    # z_j = sum_i W[j, i] * m_i + b_j
    wf = w_ref[...].astype(jnp.float32)
    z = jnp.sum(wf * m[None, :], axis=1, keepdims=True)     # (C, 1)
    z = z + b_ref[...].astype(jnp.float32)
    s = jax.nn.sigmoid(z)                                   # (C, 1)
    out = (xf + alpha_ref[...].astype(jnp.float32)) * s     # (C, T)
    o_ref[0] = out.astype(o_ref.dtype)


def _afms_fused(x, w, b2d, alpha2d):
    B, C, T = x.shape
    return pl.pallas_call(
        _afms_fused_kernel,
        out_shape=jax.ShapeDtypeStruct((B, C, T), x.dtype),
        grid_spec=pltpu.PrefetchScalarGridSpec(
            num_scalar_prefetch=0,
            grid=(B,),
            in_specs=[
                pl.BlockSpec((1, C, T), lambda i: (i, 0, 0)),   # x slab
                pl.BlockSpec((C, C), lambda i: (0, 0)),          # fc weight
                pl.BlockSpec((C, 1), lambda i: (0, 0)),          # fc bias
                pl.BlockSpec((C, 1), lambda i: (0, 0)),          # alpha
            ],
            out_specs=pl.BlockSpec((1, C, T), lambda i: (i, 0, 0)),
        ),
        compiler_params=pltpu.CompilerParams(
            dimension_semantics=("parallel",),
            vmem_limit_bytes=_VMEM_LIMIT_BYTES,
        ),
    )(x, w, b2d, alpha2d)


# ---------------------------------------------------------------------------
# Two-phase path for long T.
# ---------------------------------------------------------------------------
def _mean_kernel(x_ref, m_ref, *, t_total, t_tile, masked):
    # x_ref: (1, C, t_tile); m_ref: (1, 1, C) accumulator resident over T axis
    ti = pl.program_id(1)

    @pl.when(ti == 0)
    def _():
        m_ref[...] = jnp.zeros_like(m_ref)

    xf = x_ref[0].astype(jnp.float32)                        # f32 accumulation
    if masked:  # ragged last T tile: zero out-of-range lanes before the sum
        lane = jax.lax.broadcasted_iota(jnp.int32, xf.shape, 1)
        xf = jnp.where(ti * t_tile + lane < t_total, xf, 0.0)
    m_ref[...] += jnp.sum(xf, axis=1)[None, None, :]         # (1, 1, C)

    @pl.when(ti == pl.num_programs(1) - 1)
    def _():
        m_ref[...] = m_ref[...] * (1.0 / t_total)


def _apply_kernel(x_ref, s_ref, alpha_ref, o_ref):
    # x_ref/o_ref: (1, C, t_tile); s_ref: (1, C, 1) f32; alpha_ref: (C, 1)
    xf = x_ref[0].astype(jnp.float32)
    out = (xf + alpha_ref[...].astype(jnp.float32)) * s_ref[0]
    o_ref[0] = out.astype(o_ref.dtype)


def _pick_t_tile(C, T, itemsize):
    if T <= 512:
        return T                                  # full extent -> always legal
    budget_t = _APPLY_BLOCK_BUDGET_BYTES // max(1, C * itemsize)
    t_tile = min(T, max(512, (budget_t // 128) * 128))
    t_tile = max(128, (t_tile // 128) * 128)      # keep stores lane-dense
    # Prefer an exact divisor of T so every tile (incl. the last) is unmasked.
    for cand in range(t_tile, 127, -128):
        if T % cand == 0:
            return cand
    return t_tile


def _afms_two_phase(x, w, b, alpha2d, t_tile=None):
    B, C, T = x.shape
    if t_tile is None:
        t_tile = _pick_t_tile(C, T, x.dtype.itemsize)
    n_t = pl.cdiv(T, t_tile)
    masked = (T % t_tile) != 0

    # Phase 1a: per-(batch, channel) mean over time (Pallas, T-tiled reduction).
    means = pl.pallas_call(
        functools.partial(_mean_kernel, t_total=T, t_tile=t_tile, masked=masked),
        out_shape=jax.ShapeDtypeStruct((B, 1, C), jnp.float32),
        grid_spec=pltpu.PrefetchScalarGridSpec(
            num_scalar_prefetch=0,
            grid=(B, n_t),
            in_specs=[pl.BlockSpec((1, C, t_tile), lambda bi, ti: (bi, 0, ti))],
            out_specs=pl.BlockSpec((1, 1, C), lambda bi, ti: (bi, 0, 0)),
        ),
        compiler_params=pltpu.CompilerParams(
            dimension_semantics=("parallel", "arbitrary"),
            vmem_limit_bytes=_VMEM_LIMIT_BYTES,
        ),
    )(x)

    # Phase 1b: tiny lane-dense (B,C)@(C,C) FC + sigmoid -- left to plain XLA
    # (keeps the per-batch FC out of the hot streaming loop).
    s = jax.nn.sigmoid(
        jnp.dot(means[:, 0, :], w.T.astype(jnp.float32),
                preferred_element_type=jnp.float32)
        + b.astype(jnp.float32)[None, :]
    )                                                        # (B, C) f32
    s = s[:, :, None]                                        # (B, C, 1)

    # Phase 2: streaming elementwise apply; both grid axes are independent.
    return pl.pallas_call(
        _apply_kernel,
        out_shape=jax.ShapeDtypeStruct((B, C, T), x.dtype),
        grid_spec=pltpu.PrefetchScalarGridSpec(
            num_scalar_prefetch=0,
            grid=(B, n_t),
            in_specs=[
                pl.BlockSpec((1, C, t_tile), lambda bi, ti: (bi, 0, ti)),  # x
                pl.BlockSpec((1, C, 1), lambda bi, ti: (bi, 0, 0)),        # s
                pl.BlockSpec((C, 1), lambda bi, ti: (0, 0)),               # alpha
            ],
            out_specs=pl.BlockSpec((1, C, t_tile), lambda bi, ti: (bi, 0, ti)),
        ),
        compiler_params=pltpu.CompilerParams(
            dimension_semantics=("parallel", "parallel"),
            vmem_limit_bytes=_VMEM_LIMIT_BYTES,
        ),
    )(x, s, alpha2d)


# ---------------------------------------------------------------------------
# Public wrapper: pick the strategy from a per-generation-safe VMEM budget.
# ---------------------------------------------------------------------------
def afms_forward(x, w, b, alpha, *, force_two_phase=False, t_tile=None):
    """x: (B, C, T); w: (C, C); b: (C,); alpha: (C, 1) -> (B, C, T)."""
    B, C, T = x.shape
    alpha2d = jnp.asarray(alpha).reshape(C, 1)
    slab_bytes = C * T * x.dtype.itemsize
    fits_one_pass = (4 * slab_bytes + C * C * 4 + (64 << 10)
                     <= _ONE_PASS_BUDGET_BYTES)
    if fits_one_pass and not force_two_phase:
        return _afms_fused(x, w, jnp.asarray(b).reshape(C, 1), alpha2d)
    return _afms_two_phase(x, w, b, alpha2d, t_tile=t_tile)


def afms_reference(x, w, b, alpha):
    """Plain-JAX reference matching the PyTorch module exactly."""
    y = jnp.mean(x, axis=2)                                  # (B, C)
    y = jax.nn.sigmoid(y @ w.T + b)                          # (B, C)
    return (x + alpha[None, :, :]) * y[:, :, None]


if __name__ == "__main__":
    key = jax.random.PRNGKey(0)
    kx, kw, kb, kx2 = jax.random.split(key, 4)

    # Deterministic synthetic parameters (shapes per AFMS.__init__):
    #   alpha: (nb_dim, 1) initialized to ones; fc: Linear(nb_dim, nb_dim).
    B, C, T = 2, 4, 16
    x = jax.random.normal(kx, (B, C, T), dtype=jnp.float32)
    alpha = jnp.ones((C, 1), dtype=jnp.float32)
    bound = 1.0 / (C ** 0.5)
    w = jax.random.uniform(kw, (C, C), minval=-bound, maxval=bound,
                           dtype=jnp.float32)
    b = jax.random.uniform(kb, (C,), minval=-bound, maxval=bound,
                           dtype=jnp.float32)

    ref = afms_reference(x, w, b, alpha)

    # 1) one-pass fused path (small slab).
    out1 = jax.block_until_ready(afms_forward(x, w, b, alpha))
    assert out1.shape == (B, C, T)
    assert jnp.allclose(out1, ref, atol=1e-5, rtol=1e-5), "fused path mismatch"

    # 2) two-phase path, same shape (T_tile == T, single T tile).
    out2 = jax.block_until_ready(afms_forward(x, w, b, alpha,
                                              force_two_phase=True))
    assert jnp.allclose(out2, ref, atol=1e-5, rtol=1e-5), "two-phase mismatch"

    # 3) two-phase path with real T tiling (multi-step reduction + apply).
    B2, C2, T2, T_TILE2 = 2, 8, 1024, 256
    x2 = jax.random.normal(kx2, (B2, C2, T2), dtype=jnp.float32)
    alpha2 = jnp.ones((C2, 1), dtype=jnp.float32)
    bound2 = 1.0 / (C2 ** 0.5)
    w2 = jax.random.uniform(kw, (C2, C2), minval=-bound2, maxval=bound2,
                            dtype=jnp.float32)
    b2 = jax.random.uniform(kb, (C2,), minval=-bound2, maxval=bound2,
                            dtype=jnp.float32)
    out3 = jax.block_until_ready(afms_forward(x2, w2, b2, alpha2,
                                              force_two_phase=True,
                                              t_tile=T_TILE2))
    ref3 = afms_reference(x2, w2, b2, alpha2)
    assert jnp.allclose(out3, ref3, atol=1e-5, rtol=1e-5), "tiled path mismatch"

    print("KERNEL_OK")
</pallas_src>

<mosaic_0001>
module attributes {stable_mosaic.version = 11 : i64} {
  func.func @_afms_fused_kernel(%arg0: i32, %arg1: memref<1x4x16xf32, #tpu.memory_space<vmem>>, %arg2: memref<4x4xf32, #tpu.memory_space<vmem>>, %arg3: memref<4x1xf32, #tpu.memory_space<vmem>>, %arg4: memref<4x1xf32, #tpu.memory_space<vmem>>, %arg5: memref<1x4x16xf32, #tpu.memory_space<vmem>>) attributes {dimension_semantics = [#tpu.dimension_semantics<parallel>], iteration_bounds = array<i64: 2>, scalar_prefetch = 0 : i64, scratch_operands = 0 : i64, tpu.core_type = #tpu.core_type<tc>, window_params = [{transform_indices = @transform_0, window_bounds = array<i64: 1, 4, 16>}, {pipeline_mode = #tpu.pipeline_mode<synchronous>, transform_indices = @transform_1, window_bounds = array<i64: 4, 4>}, {pipeline_mode = #tpu.pipeline_mode<synchronous>, transform_indices = @transform_2, window_bounds = array<i64: 4, 1>}, {pipeline_mode = #tpu.pipeline_mode<synchronous>, transform_indices = @transform_3, window_bounds = array<i64: 4, 1>}, {transform_indices = @transform_4, window_bounds = array<i64: 1, 4, 16>}]} {
    %c0 = arith.constant 0 : index
    %c0_0 = arith.constant 0 : index
    %c0_1 = arith.constant 0 : index
    %0 = vector.load %arg1[%c0, %c0_0, %c0_1] : memref<1x4x16xf32, #tpu.memory_space<vmem>>, vector<1x4x16xf32>
    %1 = vector.shape_cast %0 : vector<1x4x16xf32> to vector<4x16xf32>
    %cst = arith.constant dense<0.000000e+00> : vector<4xf32>
    %2 = vector.multi_reduction <add>, %1, %cst [1] : vector<4x16xf32> to vector<4xf32>
    %cst_2 = arith.constant 1.600000e+01 : f32
    %3 = vector.broadcast %cst_2 : f32 to vector<4xf32>
    %4 = arith.divf %2, %3 : vector<4xf32>
    %c0_3 = arith.constant 0 : index
    %c0_4 = arith.constant 0 : index
    %5 = vector.load %arg2[%c0_3, %c0_4] : memref<4x4xf32, #tpu.memory_space<vmem>>, vector<4x4xf32>
    %6 = vector.shape_cast %4 : vector<4xf32> to vector<1x4xf32>
    %7 = vector.broadcast %6 : vector<1x4xf32> to vector<4x4xf32>
    %8 = arith.mulf %5, %7 : vector<4x4xf32>
    %cst_5 = arith.constant dense<0.000000e+00> : vector<4xf32>
    %9 = vector.multi_reduction <add>, %8, %cst_5 [1] : vector<4x4xf32> to vector<4xf32>
    %10 = vector.shape_cast %9 : vector<4xf32> to vector<4x1xf32>
    %c0_6 = arith.constant 0 : index
    %c0_7 = arith.constant 0 : index
    %11 = vector.load %arg3[%c0_6, %c0_7] : memref<4x1xf32, #tpu.memory_space<vmem>>, vector<4x1xf32>
    %12 = arith.addf %10, %11 : vector<4x1xf32>
    %13 = arith.negf %12 : vector<4x1xf32>
    %14 = math.exp %13 : vector<4x1xf32>
    %cst_8 = arith.constant 1.000000e+00 : f32
    %15 = vector.broadcast %cst_8 : f32 to vector<4x1xf32>
    %16 = arith.addf %15, %14 : vector<4x1xf32>
    %17 = arith.divf %15, %16 : vector<4x1xf32>
    %c0_9 = arith.constant 0 : index
    %c0_10 = arith.constant 0 : index
    %18 = vector.load %arg4[%c0_9, %c0_10] : memref<4x1xf32, #tpu.memory_space<vmem>>, vector<4x1xf32>
    %19 = vector.broadcast %18 : vector<4x1xf32> to vector<4x16xf32>
    %20 = arith.addf %1, %19 : vector<4x16xf32>
    %21 = vector.broadcast %17 : vector<4x1xf32> to vector<4x16xf32>
    %22 = arith.mulf %20, %21 : vector<4x16xf32>
    %c0_11 = arith.constant 0 : index
    %c0_12 = arith.constant 0 : index
    %c0_13 = arith.constant 0 : index
    %23 = vector.load %arg5[%c0_11, %c0_12, %c0_13] : memref<1x4x16xf32, #tpu.memory_space<vmem>>, vector<1x4x16xf32>
    %24 = vector.shape_cast %23 : vector<1x4x16xf32> to vector<4x16xf32>
    %25 = vector.shape_cast %22 : vector<4x16xf32> to vector<1x4x16xf32>
    tpu.vector_store %arg5[%c0_11, %c0_12, %c0_13], %25 {strides = array<i32>} : memref<1x4x16xf32, #tpu.memory_space<vmem>>, vector<1x4x16xf32>,
    return
  }
  func.func @transform_0(%arg0: i32) -> (i32, i32, i32) {
    %c0_i32 = arith.constant 0 : i32
    %c0_i32_0 = arith.constant 0 : i32
    %c0_i32_1 = arith.constant 0 : i32
    return %arg0, %c0_i32, %c0_i32_0 : i32, i32, i32
  }
  func.func @transform_1(%arg0: i32) -> (i32, i32) {
    %c0_i32 = arith.constant 0 : i32
    %c0_i32_0 = arith.constant 0 : i32
    %c0_i32_1 = arith.constant 0 : i32
    return %c0_i32, %c0_i32_0 : i32, i32
  }
  func.func @transform_2(%arg0: i32) -> (i32, i32) {
    %c0_i32 = arith.constant 0 : i32
    %c0_i32_0 = arith.constant 0 : i32
    %c0_i32_1 = arith.constant 0 : i32
    return %c0_i32, %c0_i32_0 : i32, i32
  }
  func.func @transform_3(%arg0: i32) -> (i32, i32) {
    %c0_i32 = arith.constant 0 : i32
    %c0_i32_0 = arith.constant 0 : i32
    %c0_i32_1 = arith.constant 0 : i32
    return %c0_i32, %c0_i32_0 : i32, i32
  }
  func.func @transform_4(%arg0: i32) -> (i32, i32, i32) {
    %c0_i32 = arith.constant 0 : i32
    %c0_i32_0 = arith.constant 0 : i32
    %c0_i32_1 = arith.constant 0 : i32
    return %arg0, %c0_i32, %c0_i32_0 : i32, i32, i32
  }
}

</mosaic_0001>

<llo_original>
// kernel: tpu_custom_call.1
$region0: #{tpu_custom_call.1}
  #allocation0 [shape = 'u32[]', space=smem, size = 0x4, offset = 0x4, fixed_abs, tag = 'smem constant byte address 0x4 - core index']
  #allocation1 [shape = 'u32[144,128]{1,0:T(1,128)}', space=vmem, size = 0x12000, scoped, tag = 'internal scratch']
  %s0 = inlined_call_operand.vmem [shape: f32[2,4,16], index: 0, kind: input, shape index: {}]
  %s1 = inlined_call_operand.vmem [shape: f32[4,4], index: 1, kind: input, shape index: {}]
  %s2 = inlined_call_operand.vmem [shape: f32[4,1], index: 2, kind: input, shape index: {}]
  %s3 = inlined_call_operand.vmem [shape: f32[4,1], index: 3, kind: input, shape index: {}]
  %s4 = inlined_call_operand.hbm [shape: f32[2,4,16], index: 4, kind: output, shape index: {}]
  %s5 = sld [smem:[#allocation0]]
  $region49: #{tpu_custom_call.1} parent=0
    _
  %s7 = ssub.s32 1, %s5
  %s8 = scalar_select 0, %s7, %s5
  $region1: #{tpu_custom_call.1} parent=0
    #allocation2 [shape = 'u8[4096]{0}', space=vmem, size = 0x1000, scoped, tag = 'output window, operand 0']
    #allocation3 [shape = 's32[2]{0}', space=sflag, size = 0x8, scoped, tag = 'scoped memory for tpu_custom_call.1']
    %9 = vsyncpa [#allocation3], 0
    %s10 = scalar_lea.sflag [#allocation3], 1
    %11 = vsyncpa %s10, 0
    loop: start=0, step=1, limit=4
    $region2: #{tpu_custom_call.1} parent=1 // loop_pre_header
      _
    $region3: #{tpu_custom_call.1} parent=1 // loop_header
      %s13 = sphi 0, %s17
      %p14 = scmp.ge.s32.totalorder %s13, 4
      %s23 = sphi 0, %s25
      %s26 = sphi 0, %s23
      %s27 = sphi 0, %s26
      %s43 = sphi 0, %s27
      %s47 = sphi 0, %s47
      %s49 = sphi 0, %s47
      %s50 = sphi 0, %s49
      %s64 = sphi 0, %s50
      %s68 = sphi 0, %s68
      %s70 = sphi 0, %s68
      %s71 = sphi 0, %s70
      %s85 = sphi 0, %s71
      %s89 = sphi 0, %s89
      %s91 = sphi 0, %s89
      %s92 = sphi 0, %s91
      %s106 = sphi 0, %s92
      %s112 = sphi 0, %s114
      %s115 = sphi 0, %s112
      %s116 = sphi 0, %s115
      %s132 = sphi 0, %s116
    $region4: #{tpu_custom_call.1} parent=1 // loop_header_branch
      %16 = sbr.rel (%p14) target = $region8
    $region5: #{tpu_custom_call.1} parent=1 // loop_body
      %s18 = ssub.s32 %s13, 1
      %s19 = ssub.s32 %s13, 2
      %s20 = sadd.s32 %s13, 1
      %s21 = ssub.s32 %s13, %s20
      %p22 = scmp.eq.s32.totalorder %s21, 0
      %s24 = sadd.s32 %s23, 1
      %s25 = scalar_select %p22, %s23, %s24
      %p28 = pneg %p22
      %p29 = scmp.eq.s32.totalorder %s13, 1
      %p30 = por %p28, %p29
      %p31 = scmp.ne.s32.totalorder %s23, %s26
      %p32 = scmp.eq.s32.totalorder %s13, 0
      %p33 = por %p31, %p32
      %p34 = scmp.ne.s32.totalorder %s23, %s26
      %p35 = scmp.eq.s32.totalorder %s18, 1
      %p36 = por %p34, %p35
      %p37 = scmp.ne.s32.totalorder %s26, %s27
      %p38 = scmp.eq.s32.totalorder %s18, 0
      %p39 = por %p37, %p38
      %p40 = scmp.ne.s32.totalorder %s26, %s27
      %p41 = scmp.eq.s32.totalorder %s19, 1
      %p42 = por %p40, %p41
      %p44 = scmp.ne.s32.totalorder %s27, %s43
      %p45 = scmp.eq.s32.totalorder %s19, 0
      %p46 = por %p44, %p45
      %s48 = sadd.s32 %s47, 1
      %p51 = scmp.eq.s32.totalorder %s13, 1
      %p52 = scmp.ne.s32.totalorder %s47, %s49
      %p53 = scmp.eq.s32.totalorder %s13, 0
      %p54 = por %p52, %p53
      %p55 = scmp.ne.s32.totalorder %s47, %s49
      %p56 = scmp.eq.s32.totalorder %s18, 1
      %p57 = por %p55, %p56
      %p58 = scmp.ne.s32.totalorder %s49, %s50
      %p59 = scmp.eq.s32.totalorder %s18, 0
      %p60 = por %p58, %p59
      %p61 = scmp.ne.s32.totalorder %s49, %s50
      %p62 = scmp.eq.s32.totalorder %s19, 1
      %p63 = por %p61, %p62
      %p65 = scmp.ne.s32.totalorder %s50, %s64
      %p66 = scmp.eq.s32.totalorder %s19, 0
      %p67 = por %p65, %p66
      %s69 = sadd.s32 %s68, 1
      %p72 = scmp.eq.s32.totalorder %s13, 1
      %p73 = scmp.ne.s32.totalorder %s68, %s70
      %p74 = scmp.eq.s32.totalorder %s13, 0
      %p75 = por %p73, %p74
      %p76 = scmp.ne.s32.totalorder %s68, %s70
      %p77 = scmp.eq.s32.totalorder %s18, 1
      %p78 = por %p76, %p77
      %p79 = scmp.ne.s32.totalorder %s70, %s71
      %p80 = scmp.eq.s32.totalorder %s18, 0
      %p81 = por %p79, %p80
      %p82 = scmp.ne.s32.totalorder %s70, %s71
      %p83 = scmp.eq.s32.totalorder %s19, 1
      %p84 = por %p82, %p83
      %p86 = scmp.ne.s32.totalorder %s71, %s85
      %p87 = scmp.eq.s32.totalorder %s19, 0
      %p88 = por %p86, %p87
      %s90 = sadd.s32 %s89, 1
      %p93 = scmp.eq.s32.totalorder %s13, 1
      %p94 = scmp.ne.s32.totalorder %s89, %s91
      %p95 = scmp.eq.s32.totalorder %s13, 0
      %p96 = por %p94, %p95
      %p97 = scmp.ne.s32.totalorder %s89, %s91
      %p98 = scmp.eq.s32.totalorder %s18, 1
      %p99 = por %p97, %p98
      %p100 = scmp.ne.s32.totalorder %s91, %s92
      %p101 = scmp.eq.s32.totalorder %s18, 0
      %p102 = por %p100, %p101
      %p103 = scmp.ne.s32.totalorder %s91, %s92
      %p104 = scmp.eq.s32.totalorder %s19, 1
      %p105 = por %p103, %p104
      %p107 = scmp.ne.s32.totalorder %s92, %s106
      %p108 = scmp.eq.s32.totalorder %s19, 0
      %p109 = por %p107, %p108
      %s110 = ssub.s32 %s13, %s20
      %p111 = scmp.eq.s32.totalorder %s110, 0
      %s113 = sadd.s32 %s112, 1
      %s114 = scalar_select %p111, %s112, %s113
      %p117 = pneg %p111
      %p118 = scmp.eq.s32.totalorder %s13, 1
      %p119 = por %p117, %p118
      %p120 = scmp.ne.s32.totalorder %s112, %s115
      %p121 = scmp.eq.s32.totalorder %s13, 0
      %p122 = por %p120, %p121
      %p123 = scmp.ne.s32.totalorder %s112, %s115
      %p124 = scmp.eq.s32.totalorder %s18, 1
      %p125 = por %p123, %p124
      %p126 = scmp.ne.s32.totalorder %s115, %s116
      %p127 = scmp.eq.s32.totalorder %s18, 0
      %p128 = por %p126, %p127
      %p129 = scmp.ne.s32.totalorder %s115, %s116
      %p130 = scmp.eq.s32.totalorder %s19, 1
      %p131 = por %p129, %p130
      %p133 = scmp.ne.s32.totalorder %s116, %s132
      %p134 = scmp.eq.s32.totalorder %s19, 0
      %p135 = por %p133, %p134
      %p136 = scmp.le.s32.totalorder 1, %s13
      %p137 = scmp.lt.s32.totalorder %s13, 3
      %p138 = pnand %p136, %p137
      %p139 = pneg %p138
      // Predicated region
      $region9: #{tpu_custom_call.1} parent=5 // pred_check
        _
      $region10: #{tpu_custom_call.1} parent=5 // pred_check_branch
        %141 = sbr.rel (%p138) target = $region12
      $region11: #{tpu_custom_call.1} parent=5 // pred_region
        %s142 = ssub.s32 %s13, 1
        // Predicated region
        $region13: #{tpu_custom_call.1} parent=11 // pred_check
          %p143 = pneg %p60
        $region14: #{tpu_custom_call.1} parent=11 // pred_check_branch
          %145 = sbr.rel (%p143) target = $region16
        $region15: #{tpu_custom_call.1} parent=11 // pred_region
          _
        $region16: #{tpu_custom_call.1} parent=11 // pred_fallthru
          _
        // Predicated region
        $region17: #{tpu_custom_call.1} parent=11 // pred_check
          %p146 = pneg %p81
        $region18: #{tpu_custom_call.1} parent=11 // pred_check_branch
          %148 = sbr.rel (%p146) target = $region20
        $region19: #{tpu_custom_call.1} parent=11 // pred_region
          _
        $region20: #{tpu_custom_call.1} parent=11 // pred_fallthru
          _
        // Predicated region
        $region21: #{tpu_custom_call.1} parent=11 // pred_check
          %p149 = pneg %p102
        $region22: #{tpu_custom_call.1} parent=11 // pred_check_branch
          %151 = sbr.rel (%p149) target = $region24
        $region23: #{tpu_custom_call.1} parent=11 // pred_region
          _
        $region24: #{tpu_custom_call.1} parent=11 // pred_fallthru
          _
      $region12: #{tpu_custom_call.1} parent=5 // pred_fallthru
        _
      %p152 = scmp.lt.s32.totalorder %s13, 2
      // Predicated region
      $region25: #{tpu_custom_call.1} parent=5 // pred_check
        %p153 = pneg %p152
      $region26: #{tpu_custom_call.1} parent=5 // pred_check_branch
        %155 = sbr.rel (%p153) target = $region28
      $region27: #{tpu_custom_call.1} parent=5 // pred_region
        // Predicated region
        $region29: #{tpu_custom_call.1} parent=27 // pred_check
          %p156 = pneg %p33
        $region30: #{tpu_custom_call.1} parent=27 // pred_check_branch
          %158 = sbr.rel (%p156) target = $region32
        $region31: #{tpu_custom_call.1} parent=27 // pred_region
          %p159 = scmp.lt.s32.totalorder %s13, 1
          %s160 = scalar_select %p159, %s13, 1
          %s161 = smul.addr %s160, 4
          %s162 = scalar_lea.vmem %s0, %s161
        $region32: #{tpu_custom_call.1} parent=27 // pred_fallthru
          _
      $region28: #{tpu_custom_call.1} parent=5 // pred_fallthru
        _
      %p163 = scmp.le.s32.totalorder 1, %s13
      %p164 = scmp.lt.s32.totalorder %s13, 3
      %p165 = pnand %p163, %p164
      %p166 = pneg %p165
      // Predicated region
      $region33: #{tpu_custom_call.1} parent=5 // pred_check
        _
      $region34: #{tpu_custom_call.1} parent=5 // pred_check_branch
        %168 = sbr.rel (%p165) target = $region36
      $region35: #{tpu_custom_call.1} parent=5 // pred_region
        %s169 = ssub.s32 %s13, 1
        %p170 = scmp.lt.s32.totalorder %s18, 1
        %s171 = scalar_select %p170, %s18, 1
        %s172 = smul.addr %s171, 4
        %s173 = scalar_lea.vmem %s0, %s172
        %p174 = pneg %p39
        %p175 = pneg %p36
        %p176 = pneg %p60
        %p177 = pneg %p57
        %p178 = pneg %p81
        %p179 = pneg %p78
        %p180 = pneg %p102
        %p181 = pneg %p99
        %p182 = pneg %p128
        %p183 = pneg %p125
        %s184 = sand.u32 %s115, 1
        %s185 = scalar_lea.sflag [#allocation3], %s184
        %s186 = sand.u32 %s115, 1
        %s187 = smul.addr %s186, 4
        %s188 = scalar_lea.vmem [#allocation2], %s187
        %p189 = scmp.lt.s32.totalorder %s18, 1
        %s190 = scalar_select %p189, %s18, 1
        %s191 = smul.addr %s190, 4
        %s192 = scalar_lea.vmem %s0, %s191
        %v193 = vld [vmem:[%s192] sm:$0xf]
        %vm194 = vcmask 125952
        %v195 = vsel %vm194, %v193, 0.0
        %196 = vadd.xlane.f32.xlu0 %v195
        %v197 = vpop.xlane.xlu0 %196
        %v198 = vrcp.pop 16.0
        %v199 = vmul.f32 %v197, %v198
        %v200 = vld [vmem:[%s1] sm:$0xf]
        %v202 = vlaneseq
        %v203 = vand.u32 %v202, 127
        %v204 = vlaneseq
        %v205 = vshrl.u32 %v204, 7
        %v206 = vsub.s32 %v203, %v205
        %v207 = vrot.slane %v199, %v206
        %vm208 = vcmask 1042434
        %v209 = vsel %vm208, %v207, %v207
        %vm210 = vcmask 1043459
        %v211 = vsel %vm210, %v207, %v209
        %v213 = vmul.f32 %v200, %v211
        %vm214 = vcmask 27648
        %v215 = vsel %vm214, %v213, 0.0
        %216 = vadd.xlane.f32.xlu0 %v215
        %v217 = vpop.xlane.xlu0 %216
        %v218 = vld [vmem:[%s2] sm:$0xf]
        %v219 = vadd.f32 %v217, %v218
        %v220 = vxor.u32 %v219, 2147483648
        %v221 = vmul.f32 %v220, 1.442695
        %v222 = vpow.pop %v221
        %v223 = vadd.f32 %v222, 1.0
        %v224 = vrcp.pop %v223
        %v225 = vmul.f32 1.0, %v224
        %v226 = vld [vmem:[%s3] sm:$0xf]
        %228 = vset.pattern.permute.xlu0 0
        %229 = vperm.xlu0 %228, %v226
        %v230 = vpop.permute.xlu0 %229
        %v232 = vadd.f32 %v193, %v230
        %234 = vset.pattern.permute.xlu0 0
        %235 = vperm.xlu0 %234, %v225
        %v236 = vpop.permute.xlu0 %235
        %v238 = vmul.f32 %v232, %v236
        %239 = vst.msk [vmem:[%s188] sm:$0xf] %vm194, %v238
        %s240 = sand.u32 %s115, 1
        %s241 = scalar_lea.sflag [#allocation3], %s240
        %s242 = sand.u32 %s115, 1
        %s243 = smul.addr %s242, 4
        %s244 = scalar_lea.vmem [#allocation2], %s243
        // Predicated region
        $region37: #{tpu_custom_call.1} parent=35 // pred_check
          %p245 = pneg %p125
        $region38: #{tpu_custom_call.1} parent=35 // pred_check_branch
          %247 = sbr.rel (%p245) target = $region40
        $region39: #{tpu_custom_call.1} parent=35 // pred_region
          %s249 = ssub.s32 64, 64
          %250 = vsyncadd %s241, %s249
          %s251 = smul.addr %s18, 64
          %s252 = scalar_lea.hbm %s4, %s251
          %s254 = sshll.u32 %s244, 4
          %s255 = int_to_ptr.vmem [resolvable:$true] %s254
          %257 = dma.vmem_to_hbm [thread:$0]  %s255, 64, %s252, %s241
        $region40: #{tpu_custom_call.1} parent=35 // pred_fallthru
          _
      $region36: #{tpu_custom_call.1} parent=5 // pred_fallthru
        _
      %p258 = scmp.le.s32.totalorder 2, %s13
      // Predicated region
      $region41: #{tpu_custom_call.1} parent=5 // pred_check
        %p259 = pneg %p258
      $region42: #{tpu_custom_call.1} parent=5 // pred_check_branch
        %261 = sbr.rel (%p259) target = $region44
      $region43: #{tpu_custom_call.1} parent=5 // pred_region
        %s262 = ssub.s32 %s13, 2
        // Predicated region
        $region45: #{tpu_custom_call.1} parent=43 // pred_check
          %p263 = pneg %p131
        $region46: #{tpu_custom_call.1} parent=43 // pred_check_branch
          %265 = sbr.rel (%p263) target = $region48
        $region47: #{tpu_custom_call.1} parent=43 // pred_region
          %s266 = sand.u32 %s116, 1
          %s267 = scalar_lea.sflag [#allocation3], %s266
          %s268 = sand.u32 %s116, 1
          %s269 = smul.addr %s268, 4
          %s270 = scalar_lea.vmem [#allocation2], %s269
          %271 = dma.done %s267, 64
        $region48: #{tpu_custom_call.1} parent=43 // pred_fallthru
          _
      $region44: #{tpu_custom_call.1} parent=5 // pred_fallthru
        _
    $region6: #{tpu_custom_call.1} parent=1 // loop_footer
      %s17 = sadd.s32 1, %s13
    $region7: #{tpu_custom_call.1} parent=1 // loop_footer_branch
      %12 = sbr.rel target = $region3
    $region8: #{tpu_custom_call.1} parent=1 // loop_exit
      _
    %272 = vsyncpa [#allocation3], 1
    %s273 = scalar_lea.sflag [#allocation3], 1
    %274 = vsyncpa %s273, 1

</llo_original>
